<compile_context>
chip_gen: v7x
topology: tpu7x:2x2x1
jax: 0.10.0
libtpu: 0.0.40
codegen_flags: <defaults>
</compile_context>

<pallas_src>
import jax
import jax.numpy as jnp
from jax.experimental import pallas as pl
from jax.experimental.pallas import tpu as pltpu


def _diffusion_kernel(time_ref, feat_ref, mass_ref, evals_ref, evecs_ref,
                      out_ref):
    # Whole-problem tile (single grid step), all f32:
    #   feat [B, V, C], mass [B, V, 1], evals [B, K, 1], evecs [B, V, K],
    #   time [1, C], out [B, V, C].
    feat = feat_ref[...]
    mass = mass_ref[...]
    evals = evals_ref[...]
    evecs = evecs_ref[...]
    t = time_ref[...]                                        # [1, C]

    # Mass-scale the features on the VPU (f32; v5e has no bf16 VPU anyway).
    x = feat * mass                                          # [B, V, C]

    # spec[b, k, c] = sum_v evecs[b, v, k] * x[b, v, c]
    # Batched MXU matmul with f32 operands / f32 accumulation: the MXU is
    # nowhere near the binding slot here, so no bf16 operand casts.
    spec = jnp.einsum('bvk,bvc->bkc', evecs, x,
                      preferred_element_type=jnp.float32)    # [B, K, C]

    # Learned per-channel exponential decay (EUP, f32).
    coefs = jnp.exp(-(evals * t))                            # [B, K, C]
    y = coefs * spec                                         # [B, K, C]

    # out[b, v, c] = sum_k evecs[b, v, k] * y[b, k, c]
    out = jnp.einsum('bvk,bkc->bvc', evecs, y,
                     preferred_element_type=jnp.float32)     # [B, V, C]
    out_ref[...] = out.astype(out_ref.dtype)


def learned_time_diffusion(feat, mass, evals, evecs, diffusion_time):
    """Spectral LearnedTimeDiffusion forward.

    feat:  [B, V, C] float32
    mass:  [B, V]    float32
    evals: [B, K]    float32
    evecs: [B, V, K] float32
    diffusion_time: [C] float32
    returns feat_diffuse [B, V, C]
    """
    B, V, C = feat.shape
    K = evals.shape[-1]

    # The PyTorch reference clamps .data in-place under no_grad(); the forward
    # value is identical.  NOTE: jnp.maximum zeroes the gradient where the
    # clamp is active, a (minor) training-semantics difference.
    time_2d = jnp.maximum(diffusion_time, 1e-8).reshape(1, C)
    mass_3d = mass.reshape(B, V, 1)
    evals_3d = evals.reshape(B, K, 1)

    cost = pl.CostEstimate(
        flops=4 * B * V * K * C,                   # two matmuls
        transcendentals=B * K * C,                 # exp(-evals * t)
        bytes_accessed=4 * (2 * B * V * C + B * V + B * K + B * V * K + C),
    )

    grid_spec = pltpu.PrefetchScalarGridSpec(
        num_scalar_prefetch=0,
        grid=(1,),   # single step: whole problem fits VMEM, no pipeline cost
        in_specs=[
            pl.BlockSpec((1, C), lambda i: (0, 0)),          # time
            pl.BlockSpec((B, V, C), lambda i: (0, 0, 0)),    # feat
            pl.BlockSpec((B, V, 1), lambda i: (0, 0, 0)),    # mass
            pl.BlockSpec((B, K, 1), lambda i: (0, 0, 0)),    # evals
            pl.BlockSpec((B, V, K), lambda i: (0, 0, 0)),    # evecs
        ],
        out_specs=pl.BlockSpec((B, V, C), lambda i: (0, 0, 0)),
    )

    return pl.pallas_call(
        _diffusion_kernel,
        out_shape=jax.ShapeDtypeStruct((B, V, C), feat.dtype),
        grid_spec=grid_spec,
        compiler_params=pltpu.CompilerParams(
            dimension_semantics=("arbitrary",),
            vmem_limit_bytes=32 << 20,             # far above the ~100 KiB used
        ),
        cost_estimate=cost,
    )(time_2d, feat, mass_3d, evals_3d, evecs)


def _reference(feat, mass, evals, evecs, diffusion_time):
    t = jnp.maximum(diffusion_time, 1e-8)
    x = feat * mass[..., None]
    feat_spec = jnp.einsum('bvk,bvc->bkc', evecs, x,
                           precision=jax.lax.Precision.HIGHEST)
    coefs = jnp.exp(-evals[..., None] * t[None, None, :])
    return jnp.einsum('bvk,bkc->bvc', evecs, coefs * feat_spec,
                      precision=jax.lax.Precision.HIGHEST)


if __name__ == "__main__":
    B, V, K, C = 2, 128, 32, 16

    key = jax.random.PRNGKey(0)
    k_feat, k_mass, k_evals, k_evecs, k_time = jax.random.split(key, 5)

    feat = jax.random.normal(k_feat, (B, V, C), dtype=jnp.float32)
    mass = jax.random.uniform(k_mass, (B, V), dtype=jnp.float32,
                              minval=0.5, maxval=1.5)
    evals = jax.random.uniform(k_evals, (B, K), dtype=jnp.float32,
                               minval=0.0, maxval=10.0)
    evecs = jax.random.normal(k_evecs, (B, V, K), dtype=jnp.float32) / jnp.sqrt(V)

    # nn.init.constant_(diffusion_time, 0.0) in __init__; perturb slightly so
    # the learned-time path is actually exercised (deterministic).
    diffusion_time = jnp.abs(
        jax.random.normal(k_time, (C,), dtype=jnp.float32)) * 0.1

    out = learned_time_diffusion(feat, mass, evals, evecs, diffusion_time)
    out = jax.block_until_ready(out)

    ref = _reference(feat, mass, evals, evecs, diffusion_time)
    assert out.shape == (B, V, C)
    # f32 operands / f32 accumulation throughout (no deliberate bf16 casts).
    # Tolerance covers the worst-case MXU f32 pass decomposition on any
    # generation; typical observed error is far smaller.
    assert jnp.allclose(out, ref, atol=5e-3, rtol=5e-3), "mismatch vs reference"

    print("KERNEL_OK")
</pallas_src>

<mosaic_0001>
module attributes {stable_mosaic.version = 11 : i64} {
  func.func @_diffusion_kernel(%arg0: i32, %arg1: memref<1x16xf32, #tpu.memory_space<vmem>>, %arg2: memref<2x128x16xf32, #tpu.memory_space<vmem>>, %arg3: memref<2x128x1xf32, #tpu.memory_space<vmem>>, %arg4: memref<2x32x1xf32, #tpu.memory_space<vmem>>, %arg5: memref<2x128x32xf32, #tpu.memory_space<vmem>>, %arg6: memref<2x128x16xf32, #tpu.memory_space<vmem>>) attributes {dimension_semantics = [#tpu.dimension_semantics<arbitrary>], iteration_bounds = array<i64: 1>, scalar_prefetch = 0 : i64, scratch_operands = 0 : i64, tpu.core_type = #tpu.core_type<tc>, window_params = [{pipeline_mode = #tpu.pipeline_mode<synchronous>, transform_indices = @transform_0, window_bounds = array<i64: 1, 16>}, {pipeline_mode = #tpu.pipeline_mode<synchronous>, transform_indices = @transform_1, window_bounds = array<i64: 2, 128, 16>}, {pipeline_mode = #tpu.pipeline_mode<synchronous>, transform_indices = @transform_2, window_bounds = array<i64: 2, 128, 1>}, {pipeline_mode = #tpu.pipeline_mode<synchronous>, transform_indices = @transform_3, window_bounds = array<i64: 2, 32, 1>}, {pipeline_mode = #tpu.pipeline_mode<synchronous>, transform_indices = @transform_4, window_bounds = array<i64: 2, 128, 32>}, {pipeline_mode = #tpu.pipeline_mode<synchronous>, transform_indices = @transform_5, window_bounds = array<i64: 2, 128, 16>}]} {
    %c0 = arith.constant 0 : index
    %c0_0 = arith.constant 0 : index
    %c0_1 = arith.constant 0 : index
    %0 = vector.load %arg2[%c0, %c0_0, %c0_1] : memref<2x128x16xf32, #tpu.memory_space<vmem>>, vector<2x128x16xf32>
    %c0_2 = arith.constant 0 : index
    %c0_3 = arith.constant 0 : index
    %c0_4 = arith.constant 0 : index
    %1 = vector.load %arg3[%c0_2, %c0_3, %c0_4] : memref<2x128x1xf32, #tpu.memory_space<vmem>>, vector<2x128x1xf32>
    %c0_5 = arith.constant 0 : index
    %c0_6 = arith.constant 0 : index
    %c0_7 = arith.constant 0 : index
    %2 = vector.load %arg4[%c0_5, %c0_6, %c0_7] : memref<2x32x1xf32, #tpu.memory_space<vmem>>, vector<2x32x1xf32>
    %c0_8 = arith.constant 0 : index
    %c0_9 = arith.constant 0 : index
    %c0_10 = arith.constant 0 : index
    %3 = vector.load %arg5[%c0_8, %c0_9, %c0_10] : memref<2x128x32xf32, #tpu.memory_space<vmem>>, vector<2x128x32xf32>
    %c0_11 = arith.constant 0 : index
    %c0_12 = arith.constant 0 : index
    %4 = vector.load %arg1[%c0_11, %c0_12] : memref<1x16xf32, #tpu.memory_space<vmem>>, vector<1x16xf32>
    %5 = vector.broadcast %1 : vector<2x128x1xf32> to vector<2x128x16xf32>
    %6 = arith.mulf %0, %5 : vector<2x128x16xf32>
    "tpu.trace_start"() <{level = 10 : i32, message = "bvk,bvc->bkc"}> : () -> ()
    %cst = arith.constant dense<0.000000e+00> : vector<2x32x16xf32>
    %7 = tpu.matmul %3, %6, %cst {dimension_numbers = #tpu.dot_dimension_numbers<[1], [1], [2], [2], [0, 0, 0, 2, 1, 2], [0], [0]>} : vector<2x128x32xf32>, vector<2x128x16xf32>, vector<2x32x16xf32> -> vector<2x32x16xf32>
    "tpu.trace_stop"() : () -> ()
    %8 = vector.shape_cast %4 : vector<1x16xf32> to vector<1x1x16xf32>
    %9 = vector.broadcast %2 : vector<2x32x1xf32> to vector<2x32x16xf32>
    %10 = vector.broadcast %8 : vector<1x1x16xf32> to vector<2x32x16xf32>
    %11 = arith.mulf %9, %10 : vector<2x32x16xf32>
    %cst_13 = arith.constant 0.000000e+00 : f32
    %12 = vector.broadcast %cst_13 : f32 to vector<2x32x16xf32>
    %13 = arith.subf %12, %11 : vector<2x32x16xf32>
    %14 = math.exp %13 : vector<2x32x16xf32>
    %15 = arith.mulf %14, %7 : vector<2x32x16xf32>
    "tpu.trace_start"() <{level = 10 : i32, message = "bvk,bkc->bvc"}> : () -> ()
    %cst_14 = arith.constant dense<0.000000e+00> : vector<2x128x16xf32>
    %16 = tpu.matmul %3, %15, %cst_14 {dimension_numbers = #tpu.dot_dimension_numbers<[2], [1], [1], [2], [0, 0, 0, 1, 1, 2], [0], [0]>} : vector<2x128x32xf32>, vector<2x32x16xf32>, vector<2x128x16xf32> -> vector<2x128x16xf32>
    "tpu.trace_stop"() : () -> ()
    %c0_15 = arith.constant 0 : index
    %c0_16 = arith.constant 0 : index
    %c0_17 = arith.constant 0 : index
    %17 = vector.load %arg6[%c0_15, %c0_16, %c0_17] : memref<2x128x16xf32, #tpu.memory_space<vmem>>, vector<2x128x16xf32>
    tpu.vector_store %arg6[%c0_15, %c0_16, %c0_17], %16 {strides = array<i32>} : memref<2x128x16xf32, #tpu.memory_space<vmem>>, vector<2x128x16xf32>,
    return
  }
  func.func @transform_0(%arg0: i32) -> (i32, i32) {
    %c0_i32 = arith.constant 0 : i32
    %c0_i32_0 = arith.constant 0 : i32
    %c0_i32_1 = arith.constant 0 : i32
    return %c0_i32, %c0_i32_0 : i32, i32
  }
  func.func @transform_1(%arg0: i32) -> (i32, i32, i32) {
    %c0_i32 = arith.constant 0 : i32
    %c0_i32_0 = arith.constant 0 : i32
    %c0_i32_1 = arith.constant 0 : i32
    %c0_i32_2 = arith.constant 0 : i32
    return %c0_i32, %c0_i32_0, %c0_i32_1 : i32, i32, i32
  }
  func.func @transform_2(%arg0: i32) -> (i32, i32, i32) {
    %c0_i32 = arith.constant 0 : i32
    %c0_i32_0 = arith.constant 0 : i32
    %c0_i32_1 = arith.constant 0 : i32
    %c0_i32_2 = arith.constant 0 : i32
    return %c0_i32, %c0_i32_0, %c0_i32_1 : i32, i32, i32
  }
  func.func @transform_3(%arg0: i32) -> (i32, i32, i32) {
    %c0_i32 = arith.constant 0 : i32
    %c0_i32_0 = arith.constant 0 : i32
    %c0_i32_1 = arith.constant 0 : i32
    %c0_i32_2 = arith.constant 0 : i32
    return %c0_i32, %c0_i32_0, %c0_i32_1 : i32, i32, i32
  }
  func.func @transform_4(%arg0: i32) -> (i32, i32, i32) {
    %c0_i32 = arith.constant 0 : i32
    %c0_i32_0 = arith.constant 0 : i32
    %c0_i32_1 = arith.constant 0 : i32
    %c0_i32_2 = arith.constant 0 : i32
    return %c0_i32, %c0_i32_0, %c0_i32_1 : i32, i32, i32
  }
  func.func @transform_5(%arg0: i32) -> (i32, i32, i32) {
    %c0_i32 = arith.constant 0 : i32
    %c0_i32_0 = arith.constant 0 : i32
    %c0_i32_1 = arith.constant 0 : i32
    %c0_i32_2 = arith.constant 0 : i32
    return %c0_i32, %c0_i32_0, %c0_i32_1 : i32, i32, i32
  }
}

</mosaic_0001>

<llo_original>
// kernel: tpu_custom_call.1
$region0: #{tpu_custom_call.1}
  #allocation0 [shape = 'u32[]', space=smem, size = 0x4, offset = 0x4, fixed_abs, tag = 'smem constant byte address 0x4 - core index']
  #allocation1 [shape = 'u32[144,128]{1,0:T(1,128)}', space=vmem, size = 0x12000, scoped, tag = 'internal scratch']
  %s0 = inlined_call_operand.vmem [shape: f32[1,16], index: 0, kind: input, shape index: {}]
  %s1 = inlined_call_operand.vmem [shape: f32[2,128,16], index: 1, kind: input, shape index: {}]
  %s2 = inlined_call_operand.vmem [shape: f32[2,128,1], index: 2, kind: input, shape index: {}]
  %s3 = inlined_call_operand.vmem [shape: f32[2,32,1], index: 3, kind: input, shape index: {}]
  %s4 = inlined_call_operand.vmem [shape: f32[2,128,32], index: 4, kind: input, shape index: {}]
  %s5 = inlined_call_operand.vmem [shape: f32[2,128,16], index: 5, kind: output, shape index: {}]
  %s6 = sld [smem:[#allocation0]]
  $region30: #{tpu_custom_call.1} parent=0
    _
  %s8 = ssub.s32 1, %s6
  %s9 = scalar_select 0, %s8, %s6
  // Predicated region
  $region2: #{tpu_custom_call.1} parent=0 // pred_check
    _
  $region3: #{tpu_custom_call.1} parent=0 // pred_check_branch
    %11 = sbr.rel (0) target = $region5
  $region4: #{tpu_custom_call.1} parent=0 // pred_region
    _
  $region5: #{tpu_custom_call.1} parent=0 // pred_fallthru
    _
  // Predicated region
  $region6: #{tpu_custom_call.1} parent=0 // pred_check
    _
  $region7: #{tpu_custom_call.1} parent=0 // pred_check_branch
    %13 = sbr.rel (0) target = $region9
  $region8: #{tpu_custom_call.1} parent=0 // pred_region
    _
  $region9: #{tpu_custom_call.1} parent=0 // pred_fallthru
    _
  // Predicated region
  $region10: #{tpu_custom_call.1} parent=0 // pred_check
    _
  $region11: #{tpu_custom_call.1} parent=0 // pred_check_branch
    %15 = sbr.rel (0) target = $region13
  $region12: #{tpu_custom_call.1} parent=0 // pred_region
    _
  $region13: #{tpu_custom_call.1} parent=0 // pred_fallthru
    _
  // Predicated region
  $region14: #{tpu_custom_call.1} parent=0 // pred_check
    _
  $region15: #{tpu_custom_call.1} parent=0 // pred_check_branch
    %17 = sbr.rel (0) target = $region17
  $region16: #{tpu_custom_call.1} parent=0 // pred_region
    _
  $region17: #{tpu_custom_call.1} parent=0 // pred_fallthru
    _
  // Predicated region
  $region18: #{tpu_custom_call.1} parent=0 // pred_check
    _
  $region19: #{tpu_custom_call.1} parent=0 // pred_check_branch
    %19 = sbr.rel (0) target = $region21
  $region20: #{tpu_custom_call.1} parent=0 // pred_region
    _
  $region21: #{tpu_custom_call.1} parent=0 // pred_fallthru
    _
  %v20 = vld [vmem:[%s1] sm:$0xff]
  %v21 = vld [vmem:[%s1 + $0x8] sm:$0xff]
  %v22 = vld [vmem:[%s1 + $0x10] sm:$0xff]
  %v23 = vld [vmem:[%s1 + $0x18] sm:$0xff]
  %v24 = vld [vmem:[%s1 + $0x20] sm:$0xff]
  %v25 = vld [vmem:[%s1 + $0x28] sm:$0xff]
  %v26 = vld [vmem:[%s1 + $0x30] sm:$0xff]
  %v27 = vld [vmem:[%s1 + $0x38] sm:$0xff]
  %v28 = vld [vmem:[%s1 + $0x40] sm:$0xff]
  %v29 = vld [vmem:[%s1 + $0x48] sm:$0xff]
  %v30 = vld [vmem:[%s1 + $0x50] sm:$0xff]
  %v31 = vld [vmem:[%s1 + $0x58] sm:$0xff]
  %v32 = vld [vmem:[%s1 + $0x60] sm:$0xff]
  %v33 = vld [vmem:[%s1 + $0x68] sm:$0xff]
  %v34 = vld [vmem:[%s1 + $0x70] sm:$0xff]
  %v35 = vld [vmem:[%s1 + $0x78] sm:$0xff]
  %v36 = vld [vmem:[%s1 + $0x80] sm:$0xff]
  %v37 = vld [vmem:[%s1 + $0x88] sm:$0xff]
  %v38 = vld [vmem:[%s1 + $0x90] sm:$0xff]
  %v39 = vld [vmem:[%s1 + $0x98] sm:$0xff]
  %v40 = vld [vmem:[%s1 + $0xa0] sm:$0xff]
  %v41 = vld [vmem:[%s1 + $0xa8] sm:$0xff]
  %v42 = vld [vmem:[%s1 + $0xb0] sm:$0xff]
  %v43 = vld [vmem:[%s1 + $0xb8] sm:$0xff]
  %v44 = vld [vmem:[%s1 + $0xc0] sm:$0xff]
  %v45 = vld [vmem:[%s1 + $0xc8] sm:$0xff]
  %v46 = vld [vmem:[%s1 + $0xd0] sm:$0xff]
  %v47 = vld [vmem:[%s1 + $0xd8] sm:$0xff]
  %v48 = vld [vmem:[%s1 + $0xe0] sm:$0xff]
  %v49 = vld [vmem:[%s1 + $0xe8] sm:$0xff]
  %v50 = vld [vmem:[%s1 + $0xf0] sm:$0xff]
  %v51 = vld [vmem:[%s1 + $0xf8] sm:$0xff]
  %v52 = vld [vmem:[%s2] sm:$0xff]
  %v53 = vld [vmem:[%s2 + $0x8] sm:$0xff]
  %v54 = vld [vmem:[%s2 + $0x10] sm:$0xff]
  %v55 = vld [vmem:[%s2 + $0x18] sm:$0xff]
  %v56 = vld [vmem:[%s2 + $0x20] sm:$0xff]
  %v57 = vld [vmem:[%s2 + $0x28] sm:$0xff]
  %v58 = vld [vmem:[%s2 + $0x30] sm:$0xff]
  %v59 = vld [vmem:[%s2 + $0x38] sm:$0xff]
  %v60 = vld [vmem:[%s2 + $0x40] sm:$0xff]
  %v61 = vld [vmem:[%s2 + $0x48] sm:$0xff]
  %v62 = vld [vmem:[%s2 + $0x50] sm:$0xff]
  %v63 = vld [vmem:[%s2 + $0x58] sm:$0xff]
  %v64 = vld [vmem:[%s2 + $0x60] sm:$0xff]
  %v65 = vld [vmem:[%s2 + $0x68] sm:$0xff]
  %v66 = vld [vmem:[%s2 + $0x70] sm:$0xff]
  %v67 = vld [vmem:[%s2 + $0x78] sm:$0xff]
  %v68 = vld [vmem:[%s2 + $0x80] sm:$0xff]
  %v69 = vld [vmem:[%s2 + $0x88] sm:$0xff]
  %v70 = vld [vmem:[%s2 + $0x90] sm:$0xff]
  %v71 = vld [vmem:[%s2 + $0x98] sm:$0xff]
  %v72 = vld [vmem:[%s2 + $0xa0] sm:$0xff]
  %v73 = vld [vmem:[%s2 + $0xa8] sm:$0xff]
  %v74 = vld [vmem:[%s2 + $0xb0] sm:$0xff]
  %v75 = vld [vmem:[%s2 + $0xb8] sm:$0xff]
  %v76 = vld [vmem:[%s2 + $0xc0] sm:$0xff]
  %v77 = vld [vmem:[%s2 + $0xc8] sm:$0xff]
  %v78 = vld [vmem:[%s2 + $0xd0] sm:$0xff]
  %v79 = vld [vmem:[%s2 + $0xd8] sm:$0xff]
  %v80 = vld [vmem:[%s2 + $0xe0] sm:$0xff]
  %v81 = vld [vmem:[%s2 + $0xe8] sm:$0xff]
  %v82 = vld [vmem:[%s2 + $0xf0] sm:$0xff]
  %v83 = vld [vmem:[%s2 + $0xf8] sm:$0xff]
  %v84 = vld [vmem:[%s3] sm:$0xff]
  %v85 = vld [vmem:[%s3 + $0x8] sm:$0xff]
  %v86 = vld [vmem:[%s3 + $0x10] sm:$0xff]
  %v87 = vld [vmem:[%s3 + $0x18] sm:$0xff]
  %v88 = vld [vmem:[%s3 + $0x20] sm:$0xff]
  %v89 = vld [vmem:[%s3 + $0x28] sm:$0xff]
  %v90 = vld [vmem:[%s3 + $0x30] sm:$0xff]
  %v91 = vld [vmem:[%s3 + $0x38] sm:$0xff]
  %v92 = vld [vmem:[%s4] sm:$0xff]
  %v93 = vld [vmem:[%s4 + $0x8] sm:$0xff]
  %v94 = vld [vmem:[%s4 + $0x10] sm:$0xff]
  %v95 = vld [vmem:[%s4 + $0x18] sm:$0xff]
  %v96 = vld [vmem:[%s4 + $0x20] sm:$0xff]
  %v97 = vld [vmem:[%s4 + $0x28] sm:$0xff]
  %v98 = vld [vmem:[%s4 + $0x30] sm:$0xff]
  %v99 = vld [vmem:[%s4 + $0x38] sm:$0xff]
  %v100 = vld [vmem:[%s4 + $0x40] sm:$0xff]
  %v101 = vld [vmem:[%s4 + $0x48] sm:$0xff]
  %v102 = vld [vmem:[%s4 + $0x50] sm:$0xff]
  %v103 = vld [vmem:[%s4 + $0x58] sm:$0xff]
  %v104 = vld [vmem:[%s4 + $0x60] sm:$0xff]
  %v105 = vld [vmem:[%s4 + $0x68] sm:$0xff]
  %v106 = vld [vmem:[%s4 + $0x70] sm:$0xff]
  %v107 = vld [vmem:[%s4 + $0x78] sm:$0xff]
  %v108 = vld [vmem:[%s4 + $0x80] sm:$0xff]
  %v109 = vld [vmem:[%s4 + $0x88] sm:$0xff]
  %v110 = vld [vmem:[%s4 + $0x90] sm:$0xff]
  %v111 = vld [vmem:[%s4 + $0x98] sm:$0xff]
  %v112 = vld [vmem:[%s4 + $0xa0] sm:$0xff]
  %v113 = vld [vmem:[%s4 + $0xa8] sm:$0xff]
  %v114 = vld [vmem:[%s4 + $0xb0] sm:$0xff]
  %v115 = vld [vmem:[%s4 + $0xb8] sm:$0xff]
  %v116 = vld [vmem:[%s4 + $0xc0] sm:$0xff]
  %v117 = vld [vmem:[%s4 + $0xc8] sm:$0xff]
  %v118 = vld [vmem:[%s4 + $0xd0] sm:$0xff]
  %v119 = vld [vmem:[%s4 + $0xd8] sm:$0xff]
  %v120 = vld [vmem:[%s4 + $0xe0] sm:$0xff]
  %v121 = vld [vmem:[%s4 + $0xe8] sm:$0xff]
  %v122 = vld [vmem:[%s4 + $0xf0] sm:$0xff]
  %v123 = vld [vmem:[%s4 + $0xf8] sm:$0xff]
  %v124 = vld [vmem:[%s0] sm:$0x1]
  %126 = vset.pattern.permute.xlu0 0
  %127 = vperm.xlu0 %126, %v52
  %v128 = vpop.permute.xlu0 %127
  %131 = vset.pattern.permute.xlu0 0
  %132 = vperm.xlu0 %131, %v53
  %v133 = vpop.permute.xlu0 %132
  %136 = vset.pattern.permute.xlu0 0
  %137 = vperm.xlu0 %136, %v54
  %v138 = vpop.permute.xlu0 %137
  %141 = vset.pattern.permute.xlu0 0
  %142 = vperm.xlu0 %141, %v55
  %v143 = vpop.permute.xlu0 %142
  %146 = vset.pattern.permute.xlu0 0
  %147 = vperm.xlu0 %146, %v56
  %v148 = vpop.permute.xlu0 %147
  %151 = vset.pattern.permute.xlu0 0
  %152 = vperm.xlu0 %151, %v57
  %v153 = vpop.permute.xlu0 %152
  %156 = vset.pattern.permute.xlu0 0
  %157 = vperm.xlu0 %156, %v58
  %v158 = vpop.permute.xlu0 %157
  %161 = vset.pattern.permute.xlu0 0
  %162 = vperm.xlu0 %161, %v59
  %v163 = vpop.permute.xlu0 %162
  %166 = vset.pattern.permute.xlu0 0
  %167 = vperm.xlu0 %166, %v60
  %v168 = vpop.permute.xlu0 %167
  %171 = vset.pattern.permute.xlu0 0
  %172 = vperm.xlu0 %171, %v61
  %v173 = vpop.permute.xlu0 %172
  %176 = vset.pattern.permute.xlu0 0
  %177 = vperm.xlu0 %176, %v62
  %v178 = vpop.permute.xlu0 %177
  %181 = vset.pattern.permute.xlu0 0
  %182 = vperm.xlu0 %181, %v63
  %v183 = vpop.permute.xlu0 %182
  %186 = vset.pattern.permute.xlu0 0
  %187 = vperm.xlu0 %186, %v64
  %v188 = vpop.permute.xlu0 %187
  %191 = vset.pattern.permute.xlu0 0
  %192 = vperm.xlu0 %191, %v65
  %v193 = vpop.permute.xlu0 %192
  %196 = vset.pattern.permute.xlu0 0
  %197 = vperm.xlu0 %196, %v66
  %v198 = vpop.permute.xlu0 %197
  %201 = vset.pattern.permute.xlu0 0
  %202 = vperm.xlu0 %201, %v67
  %v203 = vpop.permute.xlu0 %202
  %206 = vset.pattern.permute.xlu0 0
  %207 = vperm.xlu0 %206, %v68
  %v208 = vpop.permute.xlu0 %207
  %211 = vset.pattern.permute.xlu0 0
  %212 = vperm.xlu0 %211, %v69
  %v213 = vpop.permute.xlu0 %212
  %216 = vset.pattern.permute.xlu0 0
  %217 = vperm.xlu0 %216, %v70
  %v218 = vpop.permute.xlu0 %217
  %221 = vset.pattern.permute.xlu0 0
  %222 = vperm.xlu0 %221, %v71
  %v223 = vpop.permute.xlu0 %222
  %226 = vset.pattern.permute.xlu0 0
  %227 = vperm.xlu0 %226, %v72
  %v228 = vpop.permute.xlu0 %227
  %231 = vset.pattern.permute.xlu0 0
  %232 = vperm.xlu0 %231, %v73
  %v233 = vpop.permute.xlu0 %232
  %236 = vset.pattern.permute.xlu0 0
  %237 = vperm.xlu0 %236, %v74
  %v238 = vpop.permute.xlu0 %237
  %241 = vset.pattern.permute.xlu0 0
  %242 = vperm.xlu0 %241, %v75
  %v243 = vpop.permute.xlu0 %242
  %246 = vset.pattern.permute.xlu0 0
  %247 = vperm.xlu0 %246, %v76
  %v248 = vpop.permute.xlu0 %247
  %251 = vset.pattern.permute.xlu0 0
  %252 = vperm.xlu0 %251, %v77
  %v253 = vpop.permute.xlu0 %252
  %256 = vset.pattern.permute.xlu0 0
  %257 = vperm.xlu0 %256, %v78
  %v258 = vpop.permute.xlu0 %257
  %261 = vset.pattern.permute.xlu0 0
  %262 = vperm.xlu0 %261, %v79
  %v263 = vpop.permute.xlu0 %262
  %266 = vset.pattern.permute.xlu0 0
  %267 = vperm.xlu0 %266, %v80
  %v268 = vpop.permute.xlu0 %267
  %271 = vset.pattern.permute.xlu0 0
  %272 = vperm.xlu0 %271, %v81
  %v273 = vpop.permute.xlu0 %272
  %276 = vset.pattern.permute.xlu0 0
  %277 = vperm.xlu0 %276, %v82
  %v278 = vpop.permute.xlu0 %277
  %281 = vset.pattern.permute.xlu0 0
  %282 = vperm.xlu0 %281, %v83
  %v283 = vpop.permute.xlu0 %282
  %v285 = vmul.f32 %v20, %v128
  %v286 = vmul.f32 %v21, %v133
  %v287 = vmul.f32 %v22, %v138
  %v288 = vmul.f32 %v23, %v143
  %v289 = vmul.f32 %v24, %v148
  %v290 = vmul.f32 %v25, %v153
  %v291 = vmul.f32 %v26, %v158
  %v292 = vmul.f32 %v27, %v163
  %v293 = vmul.f32 %v28, %v168
  %v294 = vmul.f32 %v29, %v173
  %v295 = vmul.f32 %v30, %v178
  %v296 = vmul.f32 %v31, %v183
  %v297 = vmul.f32 %v32, %v188
  %v298 = vmul.f32 %v33, %v193
  %v299 = vmul.f32 %v34, %v198
  %v300 = vmul.f32 %v35, %v203
  %v301 = vmul.f32 %v36, %v208
  %v302 = vmul.f32 %v37, %v213
  %v303 = vmul.f32 %v38, %v218
  %v304 = vmul.f32 %v39, %v223
  %v305 = vmul.f32 %v40, %v228
  %v306 = vmul.f32 %v41, %v233
  %v307 = vmul.f32 %v42, %v238
  %v308 = vmul.f32 %v43, %v243
  %v309 = vmul.f32 %v44, %v248
  %v310 = vmul.f32 %v45, %v253
  %v311 = vmul.f32 %v46, %v258
  %v312 = vmul.f32 %v47, %v263
  %v313 = vmul.f32 %v48, %v268
  %v314 = vmul.f32 %v49, %v273
  %v315 = vmul.f32 %v50, %v278
  %v316 = vmul.f32 %v51, %v283
  %317 = vxpose.xlu0.b32.start [1/16] %v92, 128
  %318 = vxpose.xlu0.b32.cont [2/16] %v93, 128
  %319 = vxpose.xlu0.b32.cont [3/16] %v94, 128
  %320 = vxpose.xlu0.b32.cont [4/16] %v95, 128
  %321 = vxpose.xlu0.b32.cont [5/16] %v96, 128
  %322 = vxpose.xlu0.b32.cont [6/16] %v97, 128
  %323 = vxpose.xlu0.b32.cont [7/16] %v98, 128
  %324 = vxpose.xlu0.b32.cont [8/16] %v99, 128
  %325 = vxpose.xlu0.b32.cont [9/16] %v100, 128
  %326 = vxpose.xlu0.b32.cont [10/16] %v101, 128
  %327 = vxpose.xlu0.b32.cont [11/16] %v102, 128
  %328 = vxpose.xlu0.b32.cont [12/16] %v103, 128
  %329 = vxpose.xlu0.b32.cont [13/16] %v104, 128
  %330 = vxpose.xlu0.b32.cont [14/16] %v105, 128
  %331 = vxpose.xlu0.b32.cont [15/16] %v106, 128
  %332 = vxpose.xlu0.b32.end [16/16] %v107, 128
  %v333 = vpop.trf.xlu0
  %v334 = vpop.trf.xlu0
  %v335 = vpop.trf.xlu0
  %v336 = vpop.trf.xlu0
  %v337 = vpop.trf.xlu0
  %v338 = vpop.trf.xlu0
  %v339 = vpop.trf.xlu0
  %v340 = vpop.trf.xlu0
  %v341 = vpop.trf.xlu0
  %v342 = vpop.trf.xlu0
  %v343 = vpop.trf.xlu0
  %v344 = vpop.trf.xlu0
  %v345 = vpop.trf.xlu0
  %v346 = vpop.trf.xlu0
  %v347 = vpop.trf.xlu0
  %v348 = vpop.trf.xlu0
  %349 = vmatprep.subr.mxu0 0.0
  %350 = vmatpush1.msra.mxu0 %v285
  %351 = vmatprep.subr.mxu0 0.0
  %352 = vmatpush1.msra.mxu0 %v286
  %353 = vmatprep.subr.mxu0 0.0
  %354 = vmatpush1.msra.mxu0 %v287
  %355 = vmatprep.subr.mxu0 0.0
  %356 = vmatpush1.msra.mxu0 %v288
  %357 = vmatprep.subr.mxu0 0.0
  %358 = vmatpush1.msra.mxu0 %v289
  %359 = vmatprep.subr.mxu0 0.0
  %360 = vmatpush1.msra.mxu0 %v290
  %361 = vmatprep.subr.mxu0 0.0
  %362 = vmatpush1.msra.mxu0 %v291
  %363 = vmatprep.subr.mxu0 0.0
  %364 = vmatpush1.msra.mxu0 %v292
  %365 = vmatprep.subr.mxu0 0.0
  %366 = vmatpush1.msra.mxu0 %v293
  %367 = vmatprep.subr.mxu0 0.0
  %368 = vmatpush1.msra.mxu0 %v294
  %369 = vmatprep.subr.mxu0 0.0
  %370 = vmatpush1.msra.mxu0 %v295
  %371 = vmatprep.subr.mxu0 0.0
  %372 = vmatpush1.msra.mxu0 %v296
  %373 = vmatprep.subr.mxu0 0.0
  %374 = vmatpush1.msra.mxu0 %v297
  %375 = vmatprep.subr.mxu0 0.0
  %376 = vmatpush1.msra.mxu0 %v298
  %377 = vmatprep.subr.mxu0 0.0
  %378 = vmatpush1.msra.mxu0 %v299
  %379 = vmatprep.subr.mxu0 0.0
  %380 = vmatpush1.msra.mxu0 %v300
  %381 = vmatprep.subr.mxu0 0.0
  %382 = vmatpush1.msra.mxu0 0.0
  %383 = vmatprep.subr.mxu0 0.0
  %384 = vmatpush1.msra.mxu0 0.0
  %385 = vmatprep.subr.mxu0 0.0
  %386 = vmatpush1.msra.mxu0 0.0
  %387 = vmatprep.subr.mxu0 0.0
  %388 = vmatpush1.msra.mxu0 0.0
  %389 = vmatprep.subr.mxu0 0.0
  %390 = vmatpush1.msra.mxu0 0.0
  %391 = vmatprep.subr.mxu0 0.0
  %392 = vmatpush1.msra.mxu0 0.0
  %393 = vmatprep.subr.mxu0 0.0
  %394 = vmatpush1.msra.mxu0 0.0
  %395 = vmatprep.subr.mxu0 0.0
  %396 = vmatpush1.msra.mxu0 0.0
  %397 = vmatprep.subr.mxu0 0.0
  %398 = vmatpush1.msra.mxu0 0.0
  %399 = vmatprep.subr.mxu0 0.0
  %400 = vmatpush1.msra.mxu0 0.0
  %401 = vmatprep.subr.mxu0 0.0
  %402 = vmatpush1.msra.mxu0 0.0
  %403 = vmatprep.subr.mxu0 0.0
  %404 = vmatpush1.msra.mxu0 0.0
  %405 = vmatprep.subr.mxu0 0.0
  %406 = vmatpush1.msra.mxu0 0.0
  %407 = vmatprep.subr.mxu0 0.0
  %408 = vmatpush1.msra.mxu0 0.0
  %409 = vmatprep.subr.mxu0 0.0
  %410 = vmatpush1.msra.mxu0 0.0
  %411 = vmatprep.subr.mxu0 0.0
  %412 = vmatpush1.msra.mxu0 0.0
  %413 = vmatprep.mubr.f32.mxu0 0.0
  %414 = vmatmul.mubr.f32.gmra.mrb[0].mxu0 %v333
  %v415 = vpop.f32.mrb[0].mxu0
  %v416 = vadd.f32 0.0, %v415
  %v417 = vpop.f32.mrb[0].mxu0
  %418 = vmatprep.mubr.f32.mxu0 0.0
  %419 = vmatmul.mubr.f32.gmra.mrb[0].mxu0 %v334
  %v420 = vpop.f32.mrb[0].mxu0
  %v421 = vadd.f32 0.0, %v420
  %v422 = vpop.f32.mrb[0].mxu0
  %423 = vmatprep.mubr.f32.mxu0 0.0
  %424 = vmatmul.mubr.f32.gmra.mrb[0].mxu0 %v335
  %v425 = vpop.f32.mrb[0].mxu0
  %v426 = vadd.f32 0.0, %v425
  %v427 = vpop.f32.mrb[0].mxu0
  %428 = vmatprep.mubr.f32.mxu0 0.0
  %429 = vmatmul.mubr.f32.gmra.mrb[0].mxu0 %v336
  %v430 = vpop.f32.mrb[0].mxu0
  %v431 = vadd.f32 0.0, %v430
  %v432 = vpop.f32.mrb[0].mxu0
  %433 = vdwg.mxu0
  %434 = vxpose.xlu0.b32.start [1/16] %v108, 128
  %435 = vxpose.xlu0.b32.cont [2/16] %v109, 128
  %436 = vxpose.xlu0.b32.cont [3/16] %v110, 128
  %437 = vxpose.xlu0.b32.cont [4/16] %v111, 128
  %438 = vxpose.xlu0.b32.cont [5/16] %v112, 128
  %439 = vxpose.xlu0.b32.cont [6/16] %v113, 128
  %440 = vxpose.xlu0.b32.cont [7/16] %v114, 128
  %441 = vxpose.xlu0.b32.cont [8/16] %v115, 128
  %442 = vxpose.xlu0.b32.cont [9/16] %v116, 128
  %443 = vxpose.xlu0.b32.cont [10/16] %v117, 128
  %444 = vxpose.xlu0.b32.cont [11/16] %v118, 128
  %445 = vxpose.xlu0.b32.cont [12/16] %v119, 128
  %446 = vxpose.xlu0.b32.cont [13/16] %v120, 128
  %447 = vxpose.xlu0.b32.cont [14/16] %v121, 128
  %448 = vxpose.xlu0.b32.cont [15/16] %v122, 128
  %449 = vxpose.xlu0.b32.end [16/16] %v123, 128
  %v450 = vpop.trf.xlu0
  %v451 = vpop.trf.xlu0
  %v452 = vpop.trf.xlu0
  %v453 = vpop.trf.xlu0
  %v454 = vpop.trf.xlu0
  %v455 = vpop.trf.xlu0
  %v456 = vpop.trf.xlu0
  %v457 = vpop.trf.xlu0
  %v458 = vpop.trf.xlu0
  %v459 = vpop.trf.xlu0
  %v460 = vpop.trf.xlu0
  %v461 = vpop.trf.xlu0
  %v462 = vpop.trf.xlu0
  %v463 = vpop.trf.xlu0
  %v464 = vpop.trf.xlu0
  %v465 = vpop.trf.xlu0
  %466 = vmatprep.subr.mxu0 0.0
  %467 = vmatpush1.msra.mxu0 %v301
  %468 = vmatprep.subr.mxu0 0.0
  %469 = vmatpush1.msra.mxu0 %v302
  %470 = vmatprep.subr.mxu0 0.0
  %471 = vmatpush1.msra.mxu0 %v303
  %472 = vmatprep.subr.mxu0 0.0
  %473 = vmatpush1.msra.mxu0 %v304
  %474 = vmatprep.subr.mxu0 0.0
  %475 = vmatpush1.msra.mxu0 %v305
  %476 = vmatprep.subr.mxu0 0.0
  %477 = vmatpush1.msra.mxu0 %v306
  %478 = vmatprep.subr.mxu0 0.0
  %479 = vmatpush1.msra.mxu0 %v307
  %480 = vmatprep.subr.mxu0 0.0
  %481 = vmatpush1.msra.mxu0 %v308
  %482 = vmatprep.subr.mxu0 0.0
  %483 = vmatpush1.msra.mxu0 %v309
  %484 = vmatprep.subr.mxu0 0.0
  %485 = vmatpush1.msra.mxu0 %v310
  %486 = vmatprep.subr.mxu0 0.0
  %487 = vmatpush1.msra.mxu0 %v311
  %488 = vmatprep.subr.mxu0 0.0
  %489 = vmatpush1.msra.mxu0 %v312
  %490 = vmatprep.subr.mxu0 0.0
  %491 = vmatpush1.msra.mxu0 %v313
  %492 = vmatprep.subr.mxu0 0.0
  %493 = vmatpush1.msra.mxu0 %v314
  %494 = vmatprep.subr.mxu0 0.0
  %495 = vmatpush1.msra.mxu0 %v315
  %496 = vmatprep.subr.mxu0 0.0
  %497 = vmatpush1.msra.mxu0 %v316
  %498 = vmatprep.subr.mxu0 0.0
  %499 = vmatpush1.msra.mxu0 0.0
  %500 = vmatprep.subr.mxu0 0.0
  %501 = vmatpush1.msra.mxu0 0.0
  %502 = vmatprep.subr.mxu0 0.0
  %503 = vmatpush1.msra.mxu0 0.0
  %504 = vmatprep.subr.mxu0 0.0
  %505 = vmatpush1.msra.mxu0 0.0
  %506 = vmatprep.subr.mxu0 0.0
  %507 = vmatpush1.msra.mxu0 0.0
  %508 = vmatprep.subr.mxu0 0.0
  %509 = vmatpush1.msra.mxu0 0.0
  %510 = vmatprep.subr.mxu0 0.0
  %511 = vmatpush1.msra.mxu0 0.0
  %512 = vmatprep.subr.mxu0 0.0
  %513 = vmatpush1.msra.mxu0 0.0
  %514 = vmatprep.subr.mxu0 0.0
  %515 = vmatpush1.msra.mxu0 0.0
  %516 = vmatprep.subr.mxu0 0.0
  %517 = vmatpush1.msra.mxu0 0.0
  %518 = vmatprep.subr.mxu0 0.0
  %519 = vmatpush1.msra.mxu0 0.0
  %520 = vmatprep.subr.mxu0 0.0
  %521 = vmatpush1.msra.mxu0 0.0
  %522 = vmatprep.subr.mxu0 0.0
  %523 = vmatpush1.msra.mxu0 0.0
  %524 = vmatprep.subr.mxu0 0.0
  %525 = vmatpush1.msra.mxu0 0.0
  %526 = vmatprep.subr.mxu0 0.0
  %527 = vmatpush1.msra.mxu0 0.0
  %528 = vmatprep.subr.mxu0 0.0
  %529 = vmatpush1.msra.mxu0 0.0
  %530 = vmatprep.mubr.f32.mxu0 0.0
  %531 = vmatmul.mubr.f32.gmra.mrb[0].mxu0 %v450
  %v532 = vpop.f32.mrb[0].mxu0
  %v533 = vadd.f32 0.0, %v532
  %v534 = vpop.f32.mrb[0].mxu0
  %535 = vmatprep.mubr.f32.mxu0 0.0
  %536 = vmatmul.mubr.f32.gmra.mrb[0].mxu0 %v451
  %v537 = vpop.f32.mrb[0].mxu0
  %v538 = vadd.f32 0.0, %v537
  %v539 = vpop.f32.mrb[0].mxu0
  %540 = vmatprep.mubr.f32.mxu0 0.0
  %541 = vmatmul.mubr.f32.gmra.mrb[0].mxu0 %v452
  %v542 = vpop.f32.mrb[0].mxu0
  %v543 = vadd.f32 0.0, %v542
  %v544 = vpop.f32.mrb[0].mxu0
  %545 = vmatprep.mubr.f32.mxu0 0.0
  %546 = vmatmul.mubr.f32.gmra.mrb[0].mxu0 %v453
  %v547 = vpop.f32.mrb[0].mxu0
  %v548 = vadd.f32 0.0, %v547
  %v549 = vpop.f32.mrb[0].mxu0
  %550 = vdwg.mxu0
  %552 = vset.pattern.permute.xlu0 0
  %553 = vperm.xlu0 %552, %v84
  %v554 = vpop.permute.xlu0 %553
  %557 = vset.pattern.permute.xlu0 0
  %558 = vperm.xlu0 %557, %v85
  %v559 = vpop.permute.xlu0 %558
  %562 = vset.pattern.permute.xlu0 0
  %563 = vperm.xlu0 %562, %v86
  %v564 = vpop.permute.xlu0 %563
  %567 = vset.pattern.permute.xlu0 0
  %568 = vperm.xlu0 %567, %v87
  %v569 = vpop.permute.xlu0 %568
  %572 = vset.pattern.permute.xlu0 0
  %573 = vperm.xlu0 %572, %v88
  %v574 = vpop.permute.xlu0 %573
  %577 = vset.pattern.permute.xlu0 0
  %578 = vperm.xlu0 %577, %v89
  %v579 = vpop.permute.xlu0 %578
  %582 = vset.pattern.permute.xlu0 0
  %583 = vperm.xlu0 %582, %v90
  %v584 = vpop.permute.xlu0 %583
  %587 = vset.pattern.permute.xlu0 0
  %588 = vperm.xlu0 %587, %v91
  %v589 = vpop.permute.xlu0 %588
  %v592 = vlaneseq
  %v593 = vshrl.u32 %v592, 7
  %v594 = vsub.s32 0, %v593
  %v595 = vrot.slane %v124, %v594
  %v597 = vmul.f32 %v554, %v595
  %v598 = vmul.f32 %v559, %v595
  %v599 = vmul.f32 %v564, %v595
  %v600 = vmul.f32 %v569, %v595
  %v601 = vmul.f32 %v574, %v595
  %v602 = vmul.f32 %v579, %v595
  %v603 = vmul.f32 %v584, %v595
  %v604 = vmul.f32 %v589, %v595
  %v605 = vsub.f32 0.0, %v597
  %v606 = vsub.f32 0.0, %v598
  %v607 = vsub.f32 0.0, %v599
  %v608 = vsub.f32 0.0, %v600
  %v609 = vsub.f32 0.0, %v601
  %v610 = vsub.f32 0.0, %v602
  %v611 = vsub.f32 0.0, %v603
  %v612 = vsub.f32 0.0, %v604
  %v613 = vmul.f32 %v605, 1.442695
  %v614 = vpow.pop %v613
  %v615 = vmul.f32 %v606, 1.442695
  %v616 = vpow.pop %v615
  %v617 = vmul.f32 %v607, 1.442695
  %v618 = vpow.pop %v617
  %v619 = vmul.f32 %v608, 1.442695
  %v620 = vpow.pop %v619
  %v621 = vmul.f32 %v609, 1.442695
  %v622 = vpow.pop %v621
  %v623 = vmul.f32 %v610, 1.442695
  %v624 = vpow.pop %v623
  %v625 = vmul.f32 %v611, 1.442695
  %v626 = vpow.pop %v625
  %v627 = vmul.f32 %v612, 1.442695
  %v628 = vpow.pop %v627
  %v629 = vmul.f32 %v614, %v416
  %v630 = vmul.f32 %v616, %v421
  %v631 = vmul.f32 %v618, %v426
  %v632 = vmul.f32 %v620, %v431
  %v633 = vmul.f32 %v622, %v533
  %v634 = vmul.f32 %v624, %v538
  %v635 = vmul.f32 %v626, %v543
  %v636 = vmul.f32 %v628, %v548
  %vm637 = vcmask 261120
  %v639 = vsel %vm637, %v92, 0
  %v642 = vsel %vm637, %v93, 0
  %v645 = vsel %vm637, %v94, 0
  %v648 = vsel %vm637, %v95, 0
  %v651 = vsel %vm637, %v96, 0
  %v654 = vsel %vm637, %v97, 0
  %v657 = vsel %vm637, %v98, 0
  %v660 = vsel %vm637, %v99, 0
  %v663 = vsel %vm637, %v100, 0
  %v666 = vsel %vm637, %v101, 0
  %v669 = vsel %vm637, %v102, 0
  %v672 = vsel %vm637, %v103, 0
  %v675 = vsel %vm637, %v104, 0
  %v678 = vsel %vm637, %v105, 0
  %v681 = vsel %vm637, %v106, 0
  %v684 = vsel %vm637, %v107, 0
  %686 = vmatprep.subr.mxu0 0.0
  %687 = vmatpush1.msra.mxu0 %v629
  %688 = vmatprep.subr.mxu0 0.0
  %689 = vmatpush1.msra.mxu0 %v630
  %690 = vmatprep.subr.mxu0 0.0
  %691 = vmatpush1.msra.mxu0 %v631
  %692 = vmatprep.subr.mxu0 0.0
  %693 = vmatpush1.msra.mxu0 %v632
  %694 = vmatprep.subr.mxu0 0.0
  %695 = vmatpush1.msra.mxu0 0.0
  %696 = vmatprep.subr.mxu0 0.0
  %697 = vmatpush1.msra.mxu0 0.0
  %698 = vmatprep.subr.mxu0 0.0
  %699 = vmatpush1.msra.mxu0 0.0
  %700 = vmatprep.subr.mxu0 0.0
  %701 = vmatpush1.msra.mxu0 0.0
  %702 = vmatprep.subr.mxu0 0.0
  %703 = vmatpush1.msra.mxu0 0.0
  %704 = vmatprep.subr.mxu0 0.0
  %705 = vmatpush1.msra.mxu0 0.0
  %706 = vmatprep.subr.mxu0 0.0
  %707 = vmatpush1.msra.mxu0 0.0
  %708 = vmatprep.subr.mxu0 0.0
  %709 = vmatpush1.msra.mxu0 0.0
  %710 = vmatprep.subr.mxu0 0.0
  %711 = vmatpush1.msra.mxu0 0.0
  %712 = vmatprep.subr.mxu0 0.0
  %713 = vmatpush1.msra.mxu0 0.0
  %714 = vmatprep.subr.mxu0 0.0
  %715 = vmatpush1.msra.mxu0 0.0
  %716 = vmatprep.subr.mxu0 0.0
  %717 = vmatpush1.msra.mxu0 0.0
  %718 = vmatprep.subr.mxu0 0.0
  %719 = vmatpush1.msra.mxu0 0.0
  %720 = vmatprep.subr.mxu0 0.0
  %721 = vmatpush1.msra.mxu0 0.0
  %722 = vmatprep.subr.mxu0 0.0
  %723 = vmatpush1.msra.mxu0 0.0
  %724 = vmatprep.subr.mxu0 0.0
  %725 = vmatpush1.msra.mxu0 0.0
  %726 = vmatprep.subr.mxu0 0.0
  %727 = vmatpush1.msra.mxu0 0.0
  %728 = vmatprep.subr.mxu0 0.0
  %729 = vmatpush1.msra.mxu0 0.0
  %730 = vmatprep.subr.mxu0 0.0
  %731 = vmatpush1.msra.mxu0 0.0
  %732 = vmatprep.subr.mxu0 0.0
  %733 = vmatpush1.msra.mxu0 0.0
  %734 = vmatprep.subr.mxu0 0.0
  %735 = vmatpush1.msra.mxu0 0.0
  %736 = vmatprep.subr.mxu0 0.0
  %737 = vmatpush1.msra.mxu0 0.0
  %738 = vmatprep.subr.mxu0 0.0
  %739 = vmatpush1.msra.mxu0 0.0
  %740 = vmatprep.subr.mxu0 0.0
  %741 = vmatpush1.msra.mxu0 0.0
  %742 = vmatprep.subr.mxu0 0.0
  %743 = vmatpush1.msra.mxu0 0.0
  %744 = vmatprep.subr.mxu0 0.0
  %745 = vmatpush1.msra.mxu0 0.0
  %746 = vmatprep.subr.mxu0 0.0
  %747 = vmatpush1.msra.mxu0 0.0
  %748 = vmatprep.subr.mxu0 0.0
  %749 = vmatpush1.msra.mxu0 0.0
  %750 = vmatprep.mubr.f32.mxu0 0.0
  %751 = vmatmul.mubr.f32.gmra.mrb[0].mxu0 %v639
  %v752 = vpop.f32.mrb[0].mxu0
  %v753 = vadd.f32 0.0, %v752
  %v754 = vpop.f32.mrb[0].mxu0
  %755 = vmatprep.mubr.f32.mxu0 0.0
  %756 = vmatmul.mubr.f32.gmra.mrb[0].mxu0 %v642
  %v757 = vpop.f32.mrb[0].mxu0
  %v758 = vadd.f32 0.0, %v757
  %v759 = vpop.f32.mrb[0].mxu0
  %760 = vmatprep.mubr.f32.mxu0 0.0
  %761 = vmatmul.mubr.f32.gmra.mrb[0].mxu0 %v645
  %v762 = vpop.f32.mrb[0].mxu0
  %v763 = vadd.f32 0.0, %v762
  %v764 = vpop.f32.mrb[0].mxu0
  %765 = vmatprep.mubr.f32.mxu0 0.0
  %766 = vmatmul.mubr.f32.gmra.mrb[0].mxu0 %v648
  %v767 = vpop.f32.mrb[0].mxu0
  %v768 = vadd.f32 0.0, %v767
  %v769 = vpop.f32.mrb[0].mxu0
  %770 = vmatprep.mubr.f32.mxu0 0.0
  %771 = vmatmul.mubr.f32.gmra.mrb[0].mxu0 %v651
  %v772 = vpop.f32.mrb[0].mxu0
  %v773 = vadd.f32 0.0, %v772
  %v774 = vpop.f32.mrb[0].mxu0
  %775 = vmatprep.mubr.f32.mxu0 0.0
  %776 = vmatmul.mubr.f32.gmra.mrb[0].mxu0 %v654
  %v777 = vpop.f32.mrb[0].mxu0
  %v778 = vadd.f32 0.0, %v777
  %v779 = vpop.f32.mrb[0].mxu0
  %780 = vmatprep.mubr.f32.mxu0 0.0
  %781 = vmatmul.mubr.f32.gmra.mrb[0].mxu0 %v657
  %v782 = vpop.f32.mrb[0].mxu0
  %v783 = vadd.f32 0.0, %v782
  %v784 = vpop.f32.mrb[0].mxu0
  %785 = vmatprep.mubr.f32.mxu0 0.0
  %786 = vmatmul.mubr.f32.gmra.mrb[0].mxu0 %v660
  %v787 = vpop.f32.mrb[0].mxu0
  %v788 = vadd.f32 0.0, %v787
  %v789 = vpop.f32.mrb[0].mxu0
  %790 = vmatprep.mubr.f32.mxu0 0.0
  %791 = vmatmul.mubr.f32.gmra.mrb[0].mxu0 %v663
  %v792 = vpop.f32.mrb[0].mxu0
  %v793 = vadd.f32 0.0, %v792
  %v794 = vpop.f32.mrb[0].mxu0
  %795 = vmatprep.mubr.f32.mxu0 0.0
  %796 = vmatmul.mubr.f32.gmra.mrb[0].mxu0 %v666
  %v797 = vpop.f32.mrb[0].mxu0
  %v798 = vadd.f32 0.0, %v797
  %v799 = vpop.f32.mrb[0].mxu0
  %800 = vmatprep.mubr.f32.mxu0 0.0
  %801 = vmatmul.mubr.f32.gmra.mrb[0].mxu0 %v669
  %v802 = vpop.f32.mrb[0].mxu0
  %v803 = vadd.f32 0.0, %v802
  %v804 = vpop.f32.mrb[0].mxu0
  %805 = vmatprep.mubr.f32.mxu0 0.0
  %806 = vmatmul.mubr.f32.gmra.mrb[0].mxu0 %v672
  %v807 = vpop.f32.mrb[0].mxu0
  %v808 = vadd.f32 0.0, %v807
  %v809 = vpop.f32.mrb[0].mxu0
  %810 = vmatprep.mubr.f32.mxu0 0.0
  %811 = vmatmul.mubr.f32.gmra.mrb[0].mxu0 %v675
  %v812 = vpop.f32.mrb[0].mxu0
  %v813 = vadd.f32 0.0, %v812
  %v814 = vpop.f32.mrb[0].mxu0
  %815 = vmatprep.mubr.f32.mxu0 0.0
  %816 = vmatmul.mubr.f32.gmra.mrb[0].mxu0 %v678
  %v817 = vpop.f32.mrb[0].mxu0
  %v818 = vadd.f32 0.0, %v817
  %v819 = vpop.f32.mrb[0].mxu0
  %820 = vmatprep.mubr.f32.mxu0 0.0
  %821 = vmatmul.mubr.f32.gmra.mrb[0].mxu0 %v681
  %v822 = vpop.f32.mrb[0].mxu0
  %v823 = vadd.f32 0.0, %v822
  %v824 = vpop.f32.mrb[0].mxu0
  %825 = vmatprep.mubr.f32.mxu0 0.0
  %826 = vmatmul.mubr.f32.gmra.mrb[0].mxu0 %v684
  %v827 = vpop.f32.mrb[0].mxu0
  %v828 = vadd.f32 0.0, %v827
  %v829 = vpop.f32.mrb[0].mxu0
  %830 = vdwg.mxu0
  %v832 = vsel %vm637, %v108, 0
  %v835 = vsel %vm637, %v109, 0
  %v838 = vsel %vm637, %v110, 0
  %v841 = vsel %vm637, %v111, 0
  %v844 = vsel %vm637, %v112, 0
  %v847 = vsel %vm637, %v113, 0
  %v850 = vsel %vm637, %v114, 0
  %v853 = vsel %vm637, %v115, 0
  %v856 = vsel %vm637, %v116, 0
  %v859 = vsel %vm637, %v117, 0
  %v862 = vsel %vm637, %v118, 0
  %v865 = vsel %vm637, %v119, 0
  %v868 = vsel %vm637, %v120, 0
  %v871 = vsel %vm637, %v121, 0
  %v874 = vsel %vm637, %v122, 0
  %v877 = vsel %vm637, %v123, 0
  %879 = vmatprep.subr.mxu0 0.0
  %880 = vmatpush1.msra.mxu0 %v633
  %881 = vmatprep.subr.mxu0 0.0
  %882 = vmatpush1.msra.mxu0 %v634
  %883 = vmatprep.subr.mxu0 0.0
  %884 = vmatpush1.msra.mxu0 %v635
  %885 = vmatprep.subr.mxu0 0.0
  %886 = vmatpush1.msra.mxu0 %v636
  %887 = vmatprep.subr.mxu0 0.0
  %888 = vmatpush1.msra.mxu0 0.0
  %889 = vmatprep.subr.mxu0 0.0
  %890 = vmatpush1.msra.mxu0 0.0
  %891 = vmatprep.subr.mxu0 0.0
  %892 = vmatpush1.msra.mxu0 0.0
  %893 = vmatprep.subr.mxu0 0.0
  %894 = vmatpush1.msra.mxu0 0.0
  %895 = vmatprep.subr.mxu0 0.0
  %896 = vmatpush1.msra.mxu0 0.0
  %897 = vmatprep.subr.mxu0 0.0
  %898 = vmatpush1.msra.mxu0 0.0
  %899 = vmatprep.subr.mxu0 0.0
  %900 = vmatpush1.msra.mxu0 0.0
  %901 = vmatprep.subr.mxu0 0.0
  %902 = vmatpush1.msra.mxu0 0.0
  %903 = vmatprep.subr.mxu0 0.0
  %904 = vmatpush1.msra.mxu0 0.0
  %905 = vmatprep.subr.mxu0 0.0
  %906 = vmatpush1.msra.mxu0 0.0
  %907 = vmatprep.subr.mxu0 0.0
  %908 = vmatpush1.msra.mxu0 0.0
  %909 = vmatprep.subr.mxu0 0.0
  %910 = vmatpush1.msra.mxu0 0.0
  %911 = vmatprep.subr.mxu0 0.0
  %912 = vmatpush1.msra.mxu0 0.0
  %913 = vmatprep.subr.mxu0 0.0
  %914 = vmatpush1.msra.mxu0 0.0
  %915 = vmatprep.subr.mxu0 0.0
  %916 = vmatpush1.msra.mxu0 0.0
  %917 = vmatprep.subr.mxu0 0.0
  %918 = vmatpush1.msra.mxu0 0.0
  %919 = vmatprep.subr.mxu0 0.0
  %920 = vmatpush1.msra.mxu0 0.0
  %921 = vmatprep.subr.mxu0 0.0
  %922 = vmatpush1.msra.mxu0 0.0
  %923 = vmatprep.subr.mxu0 0.0
  %924 = vmatpush1.msra.mxu0 0.0
  %925 = vmatprep.subr.mxu0 0.0
  %926 = vmatpush1.msra.mxu0 0.0
  %927 = vmatprep.subr.mxu0 0.0
  %928 = vmatpush1.msra.mxu0 0.0
  %929 = vmatprep.subr.mxu0 0.0
  %930 = vmatpush1.msra.mxu0 0.0
  %931 = vmatprep.subr.mxu0 0.0
  %932 = vmatpush1.msra.mxu0 0.0
  %933 = vmatprep.subr.mxu0 0.0
  %934 = vmatpush1.msra.mxu0 0.0
  %935 = vmatprep.subr.mxu0 0.0
  %936 = vmatpush1.msra.mxu0 0.0
  %937 = vmatprep.subr.mxu0 0.0
  %938 = vmatpush1.msra.mxu0 0.0
  %939 = vmatprep.subr.mxu0 0.0
  %940 = vmatpush1.msra.mxu0 0.0
  %941 = vmatprep.subr.mxu0 0.0
  %942 = vmatpush1.msra.mxu0 0.0
  %943 = vmatprep.mubr.f32.mxu0 0.0
  %944 = vmatmul.mubr.f32.gmra.mrb[0].mxu0 %v832
  %v945 = vpop.f32.mrb[0].mxu0
  %v946 = vadd.f32 0.0, %v945
  %v947 = vpop.f32.mrb[0].mxu0
  %948 = vmatprep.mubr.f32.mxu0 0.0
  %949 = vmatmul.mubr.f32.gmra.mrb[0].mxu0 %v835
  %v950 = vpop.f32.mrb[0].mxu0
  %v951 = vadd.f32 0.0, %v950
  %v952 = vpop.f32.mrb[0].mxu0
  %953 = vmatprep.mubr.f32.mxu0 0.0
  %954 = vmatmul.mubr.f32.gmra.mrb[0].mxu0 %v838
  %v955 = vpop.f32.mrb[0].mxu0
  %v956 = vadd.f32 0.0, %v955
  %v957 = vpop.f32.mrb[0].mxu0
  %958 = vmatprep.mubr.f32.mxu0 0.0
  %959 = vmatmul.mubr.f32.gmra.mrb[0].mxu0 %v841
  %v960 = vpop.f32.mrb[0].mxu0
  %v961 = vadd.f32 0.0, %v960
  %v962 = vpop.f32.mrb[0].mxu0
  %963 = vmatprep.mubr.f32.mxu0 0.0
  %964 = vmatmul.mubr.f32.gmra.mrb[0].mxu0 %v844
  %v965 = vpop.f32.mrb[0].mxu0
  %v966 = vadd.f32 0.0, %v965
  %v967 = vpop.f32.mrb[0].mxu0
  %968 = vmatprep.mubr.f32.mxu0 0.0
  %969 = vmatmul.mubr.f32.gmra.mrb[0].mxu0 %v847
  %v970 = vpop.f32.mrb[0].mxu0
  %v971 = vadd.f32 0.0, %v970
  %v972 = vpop.f32.mrb[0].mxu0
  %973 = vmatprep.mubr.f32.mxu0 0.0
  %974 = vmatmul.mubr.f32.gmra.mrb[0].mxu0 %v850
  %v975 = vpop.f32.mrb[0].mxu0
  %v976 = vadd.f32 0.0, %v975
  %v977 = vpop.f32.mrb[0].mxu0
  %978 = vmatprep.mubr.f32.mxu0 0.0
  %979 = vmatmul.mubr.f32.gmra.mrb[0].mxu0 %v853
  %v980 = vpop.f32.mrb[0].mxu0
  %v981 = vadd.f32 0.0, %v980
  %v982 = vpop.f32.mrb[0].mxu0
  %983 = vmatprep.mubr.f32.mxu0 0.0
  %984 = vmatmul.mubr.f32.gmra.mrb[0].mxu0 %v856
  %v985 = vpop.f32.mrb[0].mxu0
  %v986 = vadd.f32 0.0, %v985
  %v987 = vpop.f32.mrb[0].mxu0
  %988 = vmatprep.mubr.f32.mxu0 0.0
  %989 = vmatmul.mubr.f32.gmra.mrb[0].mxu0 %v859
  %v990 = vpop.f32.mrb[0].mxu0
  %v991 = vadd.f32 0.0, %v990
  %v992 = vpop.f32.mrb[0].mxu0
  %993 = vmatprep.mubr.f32.mxu0 0.0
  %994 = vmatmul.mubr.f32.gmra.mrb[0].mxu0 %v862
  %v995 = vpop.f32.mrb[0].mxu0
  %v996 = vadd.f32 0.0, %v995
  %v997 = vpop.f32.mrb[0].mxu0
  %998 = vmatprep.mubr.f32.mxu0 0.0
  %999 = vmatmul.mubr.f32.gmra.mrb[0].mxu0 %v865
  %v1000 = vpop.f32.mrb[0].mxu0
  %v1001 = vadd.f32 0.0, %v1000
  %v1002 = vpop.f32.mrb[0].mxu0
  %1003 = vmatprep.mubr.f32.mxu0 0.0
  %1004 = vmatmul.mubr.f32.gmra.mrb[0].mxu0 %v868
  %v1005 = vpop.f32.mrb[0].mxu0
  %v1006 = vadd.f32 0.0, %v1005
  %v1007 = vpop.f32.mrb[0].mxu0
  %1008 = vmatprep.mubr.f32.mxu0 0.0
  %1009 = vmatmul.mubr.f32.gmra.mrb[0].mxu0 %v871
  %v1010 = vpop.f32.mrb[0].mxu0
  %v1011 = vadd.f32 0.0, %v1010
  %v1012 = vpop.f32.mrb[0].mxu0
  %1013 = vmatprep.mubr.f32.mxu0 0.0
  %1014 = vmatmul.mubr.f32.gmra.mrb[0].mxu0 %v874
  %v1015 = vpop.f32.mrb[0].mxu0
  %v1016 = vadd.f32 0.0, %v1015
  %v1017 = vpop.f32.mrb[0].mxu0
  %1018 = vmatprep.mubr.f32.mxu0 0.0
  %1019 = vmatmul.mubr.f32.gmra.mrb[0].mxu0 %v877
  %v1020 = vpop.f32.mrb[0].mxu0
  %v1021 = vadd.f32 0.0, %v1020
  %v1022 = vpop.f32.mrb[0].mxu0
  %1023 = vdwg.mxu0
  %vm1024 = vcmask 130048
  %1025 = vst.msk [vmem:[%s5] sm:$0xff] %vm1024, %v753
  %1026 = vst.msk [vmem:[%s5 + $0x8] sm:$0xff] %vm1024, %v758
  %1027 = vst.msk [vmem:[%s5 + $0x10] sm:$0xff] %vm1024, %v763
  %1028 = vst.msk [vmem:[%s5 + $0x18] sm:$0xff] %vm1024, %v768
  %1029 = vst.msk [vmem:[%s5 + $0x20] sm:$0xff] %vm1024, %v773
  %1030 = vst.msk [vmem:[%s5 + $0x28] sm:$0xff] %vm1024, %v778
  %1031 = vst.msk [vmem:[%s5 + $0x30] sm:$0xff] %vm1024, %v783
  %1032 = vst.msk [vmem:[%s5 + $0x38] sm:$0xff] %vm1024, %v788
  %1033 = vst.msk [vmem:[%s5 + $0x40] sm:$0xff] %vm1024, %v793
  %1034 = vst.msk [vmem:[%s5 + $0x48] sm:$0xff] %vm1024, %v798
  %1035 = vst.msk [vmem:[%s5 + $0x50] sm:$0xff] %vm1024, %v803
  %1036 = vst.msk [vmem:[%s5 + $0x58] sm:$0xff] %vm1024, %v808
  %1037 = vst.msk [vmem:[%s5 + $0x60] sm:$0xff] %vm1024, %v813
  %1038 = vst.msk [vmem:[%s5 + $0x68] sm:$0xff] %vm1024, %v818
  %1039 = vst.msk [vmem:[%s5 + $0x70] sm:$0xff] %vm1024, %v823
  %1040 = vst.msk [vmem:[%s5 + $0x78] sm:$0xff] %vm1024, %v828
  %1041 = vst.msk [vmem:[%s5 + $0x80] sm:$0xff] %vm1024, %v946
  %1042 = vst.msk [vmem:[%s5 + $0x88] sm:$0xff] %vm1024, %v951
  %1043 = vst.msk [vmem:[%s5 + $0x90] sm:$0xff] %vm1024, %v956
  %1044 = vst.msk [vmem:[%s5 + $0x98] sm:$0xff] %vm1024, %v961
  %1045 = vst.msk [vmem:[%s5 + $0xa0] sm:$0xff] %vm1024, %v966
  %1046 = vst.msk [vmem:[%s5 + $0xa8] sm:$0xff] %vm1024, %v971
  %1047 = vst.msk [vmem:[%s5 + $0xb0] sm:$0xff] %vm1024, %v976
  %1048 = vst.msk [vmem:[%s5 + $0xb8] sm:$0xff] %vm1024, %v981
  %1049 = vst.msk [vmem:[%s5 + $0xc0] sm:$0xff] %vm1024, %v986
  %1050 = vst.msk [vmem:[%s5 + $0xc8] sm:$0xff] %vm1024, %v991
  %1051 = vst.msk [vmem:[%s5 + $0xd0] sm:$0xff] %vm1024, %v996
  %1052 = vst.msk [vmem:[%s5 + $0xd8] sm:$0xff] %vm1024, %v1001
  %1053 = vst.msk [vmem:[%s5 + $0xe0] sm:$0xff] %vm1024, %v1006
  %1054 = vst.msk [vmem:[%s5 + $0xe8] sm:$0xff] %vm1024, %v1011
  %1055 = vst.msk [vmem:[%s5 + $0xf0] sm:$0xff] %vm1024, %v1016
  %1056 = vst.msk [vmem:[%s5 + $0xf8] sm:$0xff] %vm1024, %v1021
  // Predicated region
  $region22: #{tpu_custom_call.1} parent=0 // pred_check
    _
  $region23: #{tpu_custom_call.1} parent=0 // pred_check_branch
    %1058 = sbr.rel (0) target = $region25
  $region24: #{tpu_custom_call.1} parent=0 // pred_region
    _
  $region25: #{tpu_custom_call.1} parent=0 // pred_fallthru
    _
  // Predicated region
  $region26: #{tpu_custom_call.1} parent=0 // pred_check
    _
  $region27: #{tpu_custom_call.1} parent=0 // pred_check_branch
    %1060 = sbr.rel (0) target = $region29
  $region28: #{tpu_custom_call.1} parent=0 // pred_region
    _
  $region29: #{tpu_custom_call.1} parent=0 // pred_fallthru
    _

</llo_original>
